<compile_context>
chip_gen: v5e
topology: v5e:2x2
jax: 0.10.0
libtpu: 0.0.40
codegen_flags: <defaults>
</compile_context>

<pallas_src>
import jax
import jax.numpy as jnp
from jax.experimental import pallas as pl
from jax.experimental.pallas import tpu as pltpu


def _relu_kernel(x_ref, o_ref):
    # Single VPU compare-select on the VMEM-resident tile.
    o_ref[...] = jnp.maximum(x_ref[...], 0.0)


def _relu_resident(x2d: jax.Array) -> jax.Array:
    """Whole slab resident in VMEM, no grid. For small activations."""
    nbytes = x2d.size * x2d.dtype.itemsize
    return pl.pallas_call(
        _relu_kernel,
        out_shape=jax.ShapeDtypeStruct(x2d.shape, x2d.dtype),
        in_specs=[pl.BlockSpec(memory_space=pltpu.MemorySpace.VMEM)],
        out_specs=pl.BlockSpec(memory_space=pltpu.MemorySpace.VMEM),
        input_output_aliases={0: 0},  # in-place (effective via jit donation)
        cost_estimate=pl.CostEstimate(
            flops=x2d.size, transcendentals=0, bytes_accessed=2 * nbytes),
    )(x2d)


def _relu_gridded(x2d: jax.Array, block_rows: int) -> jax.Array:
    """1-D row-gridded path for large activations (lane-dense blocks)."""
    rows, cols = x2d.shape
    nbytes = x2d.size * x2d.dtype.itemsize
    return pl.pallas_call(
        _relu_kernel,
        out_shape=jax.ShapeDtypeStruct(x2d.shape, x2d.dtype),
        grid=(pl.cdiv(rows, block_rows),),
        in_specs=[pl.BlockSpec((block_rows, cols), lambda i: (i, 0))],
        out_specs=pl.BlockSpec((block_rows, cols), lambda i: (i, 0)),
        input_output_aliases={0: 0},
        compiler_params=pltpu.CompilerParams(
            dimension_semantics=("parallel",)),
        cost_estimate=pl.CostEstimate(
            flops=x2d.size, transcendentals=0, bytes_accessed=2 * nbytes),
    )(x2d)


# Whole-array VMEM residency threshold: below this, skip the grid entirely.
_SMALL_BYTES = 4 * 1024 * 1024
# Per-buffer block-byte cap for the gridded path (fits v7x 32 MiB scoped VMEM
# with in+out double-buffering and headroom).
_BLOCK_BYTES = 4 * 1024 * 1024
# Lane widths (multiples of 128) tried for the gridded large-input layout.
_LANE_CANDIDATES = (8192, 4096, 2048, 1024, 512, 256, 128)


def _sublane_packing(dtype) -> int:
    # Rows per vreg: 8 for 32-bit, 16 for 16-bit, 32 for 8-bit dtypes.
    return {4: 8, 2: 16, 1: 32}.get(jnp.dtype(dtype).itemsize, 8)


def relu_pallas(x: jax.Array) -> jax.Array:
    """ReLU over an NCHW tensor, computed in a Pallas TPU kernel.

    The tensor is viewed as a lane-dense 2D slab (long last axis -> full-width
    vector stores). Small activations are processed whole-array-in-VMEM with
    no grid; large ones take a 1-D parallel grid with <=4 MiB lane-dense
    blocks.
    """
    total = x.size
    itemsize = jnp.dtype(x.dtype).itemsize
    packing = _sublane_packing(x.dtype)

    if total * itemsize <= _SMALL_BYTES:
        # Small path: rows = largest divisor of total among packing, .., 4, 2.
        rows = 1
        r = packing
        while r > 1:
            if total % r == 0:
                rows = r
                break
            r //= 2
        out2d = _relu_resident(x.reshape(rows, total // rows))
        return out2d.reshape(x.shape)

    # Large path: pick a lane width that divides total, grid over rows.
    for cols in _LANE_CANDIDATES:
        if total % cols == 0 and (total // cols) >= packing:
            rows = total // cols
            block_rows = max(_BLOCK_BYTES // (cols * itemsize), packing)
            block_rows = (block_rows // packing) * packing
            block_rows = min(block_rows, rows)
            out2d = _relu_gridded(x.reshape(rows, cols), block_rows)
            return out2d.reshape(x.shape)

    # TODO(synk): no multiple-of-128 lane factorization; fall back to the
    # gridless slab (correct, but may need vmem_limit_bytes for huge inputs).
    rows = packing if total % packing == 0 else 1
    out2d = _relu_resident(x.reshape(rows, total // rows))
    return out2d.reshape(x.shape)


# Donation makes the pallas_call aliasing effective (true in-place ReLU),
# matching the PyTorch module's inplace=True semantics.
_relu_jit = jax.jit(relu_pallas, donate_argnums=0)


class M:
    """JAX/Pallas equivalent of the PyTorch module (a single inplace ReLU)."""

    def __call__(self, x336):
        return _relu_jit(x336)


if __name__ == "__main__":
    key = jax.random.PRNGKey(0)
    # Same shape as the reference module's input: [1, 1512, 7, 7] (~290 KiB).
    x336 = jax.random.normal(key, (1, 1512, 7, 7), dtype=jnp.float32)

    # Compute the reference and capture metadata BEFORE the call: the input
    # buffer is donated to the kernel and is invalid afterwards.
    ref = jnp.maximum(x336, 0.0)
    in_shape, in_dtype = x336.shape, x336.dtype

    model = M()
    y = jax.block_until_ready(model(x336))

    assert y.shape == in_shape and y.dtype == in_dtype
    assert bool(jnp.all(y == ref))

    print("KERNEL_OK")
</pallas_src>

<mosaic_0001>
module attributes {stable_mosaic.version = 11 : i64} {
  func.func @_relu_kernel(%arg0: memref<8x9261xf32, #tpu.memory_space<vmem>>, %arg1: memref<8x9261xf32, #tpu.memory_space<vmem>>) attributes {dimension_semantics = [], scalar_prefetch = 0 : i64, scratch_operands = 0 : i64, tpu.core_type = #tpu.core_type<tc>} {
    %c0 = arith.constant 0 : index
    %c0_0 = arith.constant 0 : index
    %0 = vector.load %arg0[%c0, %c0_0] : memref<8x9261xf32, #tpu.memory_space<vmem>>, vector<8x9261xf32>
    %cst = arith.constant 0.000000e+00 : f32
    %1 = vector.broadcast %cst : f32 to vector<8x9261xf32>
    %2 = arith.maximumf %0, %1 : vector<8x9261xf32>
    %c0_1 = arith.constant 0 : index
    %c0_2 = arith.constant 0 : index
    %3 = vector.load %arg1[%c0_1, %c0_2] : memref<8x9261xf32, #tpu.memory_space<vmem>>, vector<8x9261xf32>
    tpu.vector_store %arg1[%c0_1, %c0_2], %2 {strides = array<i32>} : memref<8x9261xf32, #tpu.memory_space<vmem>>, vector<8x9261xf32>,
    return
  }
}

</mosaic_0001>

<llo_original>
// kernel: relu_pallas.1
$region0: #{relu_pallas.1}
  #allocation0 [shape = 'u32[]', space=smem, size = 0x4, offset = 0x4, fixed_abs, tag = 'smem constant byte address 0x4 - core index']
  #allocation1 [shape = 'u32[72,128]{1,0:T(1,128)}', space=vmem, size = 0x9000, scoped, tag = 'internal scratch']
  %s0 = inlined_call_operand.vmem [shape: f32[8,9261], index: 0, kind: input, shape index: {}, may-alias: {0,1}]
  %s1 = inlined_call_operand.vmem [shape: f32[8,9261], index: 1, kind: output, shape index: {}, may-alias: {0,1}]
  %s2 = sld [smem:[#allocation0]]
  $region14: #{relu_pallas.1} parent=0
    _
  %s4 = ssub.s32 1, %s2
  %s5 = scalar_select 0, %s4, %s2
  // Predicated region
  $region2: #{relu_pallas.1} parent=0 // pred_check
    _
  $region3: #{relu_pallas.1} parent=0 // pred_check_branch
    %7 = sbr.rel (0) target = $region5
  $region4: #{relu_pallas.1} parent=0 // pred_region
    _
  $region5: #{relu_pallas.1} parent=0 // pred_fallthru
    _
  %v8 = vld [vmem:[%s0] sm:$0xff]
  %v9 = vld [vmem:[%s0 + $0x8] sm:$0xff]
  %v10 = vld [vmem:[%s0 + $0x10] sm:$0xff]
  %v11 = vld [vmem:[%s0 + $0x18] sm:$0xff]
  %v12 = vld [vmem:[%s0 + $0x20] sm:$0xff]
  %v13 = vld [vmem:[%s0 + $0x28] sm:$0xff]
  %v14 = vld [vmem:[%s0 + $0x30] sm:$0xff]
  %v15 = vld [vmem:[%s0 + $0x38] sm:$0xff]
  %v16 = vld [vmem:[%s0 + $0x40] sm:$0xff]
  %v17 = vld [vmem:[%s0 + $0x48] sm:$0xff]
  %v18 = vld [vmem:[%s0 + $0x50] sm:$0xff]
  %v19 = vld [vmem:[%s0 + $0x58] sm:$0xff]
  %v20 = vld [vmem:[%s0 + $0x60] sm:$0xff]
  %v21 = vld [vmem:[%s0 + $0x68] sm:$0xff]
  %v22 = vld [vmem:[%s0 + $0x70] sm:$0xff]
  %v23 = vld [vmem:[%s0 + $0x78] sm:$0xff]
  %v24 = vld [vmem:[%s0 + $0x80] sm:$0xff]
  %v25 = vld [vmem:[%s0 + $0x88] sm:$0xff]
  %v26 = vld [vmem:[%s0 + $0x90] sm:$0xff]
  %v27 = vld [vmem:[%s0 + $0x98] sm:$0xff]
  %v28 = vld [vmem:[%s0 + $0xa0] sm:$0xff]
  %v29 = vld [vmem:[%s0 + $0xa8] sm:$0xff]
  %v30 = vld [vmem:[%s0 + $0xb0] sm:$0xff]
  %v31 = vld [vmem:[%s0 + $0xb8] sm:$0xff]
  %v32 = vld [vmem:[%s0 + $0xc0] sm:$0xff]
  %v33 = vld [vmem:[%s0 + $0xc8] sm:$0xff]
  %v34 = vld [vmem:[%s0 + $0xd0] sm:$0xff]
  %v35 = vld [vmem:[%s0 + $0xd8] sm:$0xff]
  %v36 = vld [vmem:[%s0 + $0xe0] sm:$0xff]
  %v37 = vld [vmem:[%s0 + $0xe8] sm:$0xff]
  %v38 = vld [vmem:[%s0 + $0xf0] sm:$0xff]
  %v39 = vld [vmem:[%s0 + $0xf8] sm:$0xff]
  %v40 = vld [vmem:[%s0 + $0x100] sm:$0xff]
  %v41 = vld [vmem:[%s0 + $0x108] sm:$0xff]
  %v42 = vld [vmem:[%s0 + $0x110] sm:$0xff]
  %v43 = vld [vmem:[%s0 + $0x118] sm:$0xff]
  %v44 = vld [vmem:[%s0 + $0x120] sm:$0xff]
  %v45 = vld [vmem:[%s0 + $0x128] sm:$0xff]
  %v46 = vld [vmem:[%s0 + $0x130] sm:$0xff]
  %v47 = vld [vmem:[%s0 + $0x138] sm:$0xff]
  %v48 = vld [vmem:[%s0 + $0x140] sm:$0xff]
  %v49 = vld [vmem:[%s0 + $0x148] sm:$0xff]
  %v50 = vld [vmem:[%s0 + $0x150] sm:$0xff]
  %v51 = vld [vmem:[%s0 + $0x158] sm:$0xff]
  %v52 = vld [vmem:[%s0 + $0x160] sm:$0xff]
  %v53 = vld [vmem:[%s0 + $0x168] sm:$0xff]
  %v54 = vld [vmem:[%s0 + $0x170] sm:$0xff]
  %v55 = vld [vmem:[%s0 + $0x178] sm:$0xff]
  %v56 = vld [vmem:[%s0 + $0x180] sm:$0xff]
  %v57 = vld [vmem:[%s0 + $0x188] sm:$0xff]
  %v58 = vld [vmem:[%s0 + $0x190] sm:$0xff]
  %v59 = vld [vmem:[%s0 + $0x198] sm:$0xff]
  %v60 = vld [vmem:[%s0 + $0x1a0] sm:$0xff]
  %v61 = vld [vmem:[%s0 + $0x1a8] sm:$0xff]
  %v62 = vld [vmem:[%s0 + $0x1b0] sm:$0xff]
  %v63 = vld [vmem:[%s0 + $0x1b8] sm:$0xff]
  %v64 = vld [vmem:[%s0 + $0x1c0] sm:$0xff]
  %v65 = vld [vmem:[%s0 + $0x1c8] sm:$0xff]
  %v66 = vld [vmem:[%s0 + $0x1d0] sm:$0xff]
  %v67 = vld [vmem:[%s0 + $0x1d8] sm:$0xff]
  %v68 = vld [vmem:[%s0 + $0x1e0] sm:$0xff]
  %v69 = vld [vmem:[%s0 + $0x1e8] sm:$0xff]
  %v70 = vld [vmem:[%s0 + $0x1f0] sm:$0xff]
  %v71 = vld [vmem:[%s0 + $0x1f8] sm:$0xff]
  %v72 = vld [vmem:[%s0 + $0x200] sm:$0xff]
  %v73 = vld [vmem:[%s0 + $0x208] sm:$0xff]
  %v74 = vld [vmem:[%s0 + $0x210] sm:$0xff]
  %v75 = vld [vmem:[%s0 + $0x218] sm:$0xff]
  %v76 = vld [vmem:[%s0 + $0x220] sm:$0xff]
  %v77 = vld [vmem:[%s0 + $0x228] sm:$0xff]
  %v78 = vld [vmem:[%s0 + $0x230] sm:$0xff]
  %v79 = vld [vmem:[%s0 + $0x238] sm:$0xff]
  %v80 = vld [vmem:[%s0 + $0x240] sm:$0xff]
  %v81 = vmax.f32 %v8, 0.0
  %v82 = vmax.f32 %v9, 0.0
  %v83 = vmax.f32 %v10, 0.0
  %v84 = vmax.f32 %v11, 0.0
  %v85 = vmax.f32 %v12, 0.0
  %v86 = vmax.f32 %v13, 0.0
  %v87 = vmax.f32 %v14, 0.0
  %v88 = vmax.f32 %v15, 0.0
  %v89 = vmax.f32 %v16, 0.0
  %v90 = vmax.f32 %v17, 0.0
  %v91 = vmax.f32 %v18, 0.0
  %v92 = vmax.f32 %v19, 0.0
  %v93 = vmax.f32 %v20, 0.0
  %v94 = vmax.f32 %v21, 0.0
  %v95 = vmax.f32 %v22, 0.0
  %v96 = vmax.f32 %v23, 0.0
  %v97 = vmax.f32 %v24, 0.0
  %v98 = vmax.f32 %v25, 0.0
  %v99 = vmax.f32 %v26, 0.0
  %v100 = vmax.f32 %v27, 0.0
  %v101 = vmax.f32 %v28, 0.0
  %v102 = vmax.f32 %v29, 0.0
  %v103 = vmax.f32 %v30, 0.0
  %v104 = vmax.f32 %v31, 0.0
  %v105 = vmax.f32 %v32, 0.0
  %v106 = vmax.f32 %v33, 0.0
  %v107 = vmax.f32 %v34, 0.0
  %v108 = vmax.f32 %v35, 0.0
  %v109 = vmax.f32 %v36, 0.0
  %v110 = vmax.f32 %v37, 0.0
  %v111 = vmax.f32 %v38, 0.0
  %v112 = vmax.f32 %v39, 0.0
  %v113 = vmax.f32 %v40, 0.0
  %v114 = vmax.f32 %v41, 0.0
  %v115 = vmax.f32 %v42, 0.0
  %v116 = vmax.f32 %v43, 0.0
  %v117 = vmax.f32 %v44, 0.0
  %v118 = vmax.f32 %v45, 0.0
  %v119 = vmax.f32 %v46, 0.0
  %v120 = vmax.f32 %v47, 0.0
  %v121 = vmax.f32 %v48, 0.0
  %v122 = vmax.f32 %v49, 0.0
  %v123 = vmax.f32 %v50, 0.0
  %v124 = vmax.f32 %v51, 0.0
  %v125 = vmax.f32 %v52, 0.0
  %v126 = vmax.f32 %v53, 0.0
  %v127 = vmax.f32 %v54, 0.0
  %v128 = vmax.f32 %v55, 0.0
  %v129 = vmax.f32 %v56, 0.0
  %v130 = vmax.f32 %v57, 0.0
  %v131 = vmax.f32 %v58, 0.0
  %v132 = vmax.f32 %v59, 0.0
  %v133 = vmax.f32 %v60, 0.0
  %v134 = vmax.f32 %v61, 0.0
  %v135 = vmax.f32 %v62, 0.0
  %v136 = vmax.f32 %v63, 0.0
  %v137 = vmax.f32 %v64, 0.0
  %v138 = vmax.f32 %v65, 0.0
  %v139 = vmax.f32 %v66, 0.0
  %v140 = vmax.f32 %v67, 0.0
  %v141 = vmax.f32 %v68, 0.0
  %v142 = vmax.f32 %v69, 0.0
  %v143 = vmax.f32 %v70, 0.0
  %v144 = vmax.f32 %v71, 0.0
  %v145 = vmax.f32 %v72, 0.0
  %v146 = vmax.f32 %v73, 0.0
  %v147 = vmax.f32 %v74, 0.0
  %v148 = vmax.f32 %v75, 0.0
  %v149 = vmax.f32 %v76, 0.0
  %v150 = vmax.f32 %v77, 0.0
  %v151 = vmax.f32 %v78, 0.0
  %v152 = vmax.f32 %v79, 0.0
  %v153 = vmax.f32 %v80, 0.0
  %154 = vst [vmem:[%s1] sm:$0xff] %v81
  %155 = vst [vmem:[%s1 + $0x8] sm:$0xff] %v82
  %156 = vst [vmem:[%s1 + $0x10] sm:$0xff] %v83
  %157 = vst [vmem:[%s1 + $0x18] sm:$0xff] %v84
  %158 = vst [vmem:[%s1 + $0x20] sm:$0xff] %v85
  %159 = vst [vmem:[%s1 + $0x28] sm:$0xff] %v86
  %160 = vst [vmem:[%s1 + $0x30] sm:$0xff] %v87
  %161 = vst [vmem:[%s1 + $0x38] sm:$0xff] %v88
  %162 = vst [vmem:[%s1 + $0x40] sm:$0xff] %v89
  %163 = vst [vmem:[%s1 + $0x48] sm:$0xff] %v90
  %164 = vst [vmem:[%s1 + $0x50] sm:$0xff] %v91
  %165 = vst [vmem:[%s1 + $0x58] sm:$0xff] %v92
  %166 = vst [vmem:[%s1 + $0x60] sm:$0xff] %v93
  %167 = vst [vmem:[%s1 + $0x68] sm:$0xff] %v94
  %168 = vst [vmem:[%s1 + $0x70] sm:$0xff] %v95
  %169 = vst [vmem:[%s1 + $0x78] sm:$0xff] %v96
  %170 = vst [vmem:[%s1 + $0x80] sm:$0xff] %v97
  %171 = vst [vmem:[%s1 + $0x88] sm:$0xff] %v98
  %172 = vst [vmem:[%s1 + $0x90] sm:$0xff] %v99
  %173 = vst [vmem:[%s1 + $0x98] sm:$0xff] %v100
  %174 = vst [vmem:[%s1 + $0xa0] sm:$0xff] %v101
  %175 = vst [vmem:[%s1 + $0xa8] sm:$0xff] %v102
  %176 = vst [vmem:[%s1 + $0xb0] sm:$0xff] %v103
  %177 = vst [vmem:[%s1 + $0xb8] sm:$0xff] %v104
  %178 = vst [vmem:[%s1 + $0xc0] sm:$0xff] %v105
  %179 = vst [vmem:[%s1 + $0xc8] sm:$0xff] %v106
  %180 = vst [vmem:[%s1 + $0xd0] sm:$0xff] %v107
  %181 = vst [vmem:[%s1 + $0xd8] sm:$0xff] %v108
  %182 = vst [vmem:[%s1 + $0xe0] sm:$0xff] %v109
  %183 = vst [vmem:[%s1 + $0xe8] sm:$0xff] %v110
  %184 = vst [vmem:[%s1 + $0xf0] sm:$0xff] %v111
  %185 = vst [vmem:[%s1 + $0xf8] sm:$0xff] %v112
  %186 = vst [vmem:[%s1 + $0x100] sm:$0xff] %v113
  %187 = vst [vmem:[%s1 + $0x108] sm:$0xff] %v114
  %188 = vst [vmem:[%s1 + $0x110] sm:$0xff] %v115
  %189 = vst [vmem:[%s1 + $0x118] sm:$0xff] %v116
  %190 = vst [vmem:[%s1 + $0x120] sm:$0xff] %v117
  %191 = vst [vmem:[%s1 + $0x128] sm:$0xff] %v118
  %192 = vst [vmem:[%s1 + $0x130] sm:$0xff] %v119
  %193 = vst [vmem:[%s1 + $0x138] sm:$0xff] %v120
  %194 = vst [vmem:[%s1 + $0x140] sm:$0xff] %v121
  %195 = vst [vmem:[%s1 + $0x148] sm:$0xff] %v122
  %196 = vst [vmem:[%s1 + $0x150] sm:$0xff] %v123
  %197 = vst [vmem:[%s1 + $0x158] sm:$0xff] %v124
  %198 = vst [vmem:[%s1 + $0x160] sm:$0xff] %v125
  %199 = vst [vmem:[%s1 + $0x168] sm:$0xff] %v126
  %200 = vst [vmem:[%s1 + $0x170] sm:$0xff] %v127
  %201 = vst [vmem:[%s1 + $0x178] sm:$0xff] %v128
  %202 = vst [vmem:[%s1 + $0x180] sm:$0xff] %v129
  %203 = vst [vmem:[%s1 + $0x188] sm:$0xff] %v130
  %204 = vst [vmem:[%s1 + $0x190] sm:$0xff] %v131
  %205 = vst [vmem:[%s1 + $0x198] sm:$0xff] %v132
  %206 = vst [vmem:[%s1 + $0x1a0] sm:$0xff] %v133
  %207 = vst [vmem:[%s1 + $0x1a8] sm:$0xff] %v134
  %208 = vst [vmem:[%s1 + $0x1b0] sm:$0xff] %v135
  %209 = vst [vmem:[%s1 + $0x1b8] sm:$0xff] %v136
  %210 = vst [vmem:[%s1 + $0x1c0] sm:$0xff] %v137
  %211 = vst [vmem:[%s1 + $0x1c8] sm:$0xff] %v138
  %212 = vst [vmem:[%s1 + $0x1d0] sm:$0xff] %v139
  %213 = vst [vmem:[%s1 + $0x1d8] sm:$0xff] %v140
  %214 = vst [vmem:[%s1 + $0x1e0] sm:$0xff] %v141
  %215 = vst [vmem:[%s1 + $0x1e8] sm:$0xff] %v142
  %216 = vst [vmem:[%s1 + $0x1f0] sm:$0xff] %v143
  %217 = vst [vmem:[%s1 + $0x1f8] sm:$0xff] %v144
  %218 = vst [vmem:[%s1 + $0x200] sm:$0xff] %v145
  %219 = vst [vmem:[%s1 + $0x208] sm:$0xff] %v146
  %220 = vst [vmem:[%s1 + $0x210] sm:$0xff] %v147
  %221 = vst [vmem:[%s1 + $0x218] sm:$0xff] %v148
  %222 = vst [vmem:[%s1 + $0x220] sm:$0xff] %v149
  %223 = vst [vmem:[%s1 + $0x228] sm:$0xff] %v150
  %224 = vst [vmem:[%s1 + $0x230] sm:$0xff] %v151
  %225 = vst [vmem:[%s1 + $0x238] sm:$0xff] %v152
  %vm226 = vcmask 367616
  %227 = vst.msk [vmem:[%s1 + $0x240] sm:$0xff] %vm226, %v153
  // Predicated region
  $region6: #{relu_pallas.1} parent=0 // pred_check
    _
  $region7: #{relu_pallas.1} parent=0 // pred_check_branch
    %229 = sbr.rel (0) target = $region9
  $region8: #{relu_pallas.1} parent=0 // pred_region
    _
  $region9: #{relu_pallas.1} parent=0 // pred_fallthru
    _
  // Predicated region
  $region10: #{relu_pallas.1} parent=0 // pred_check
    _
  $region11: #{relu_pallas.1} parent=0 // pred_check_branch
    %231 = sbr.rel (0) target = $region13
  $region12: #{relu_pallas.1} parent=0 // pred_region
    _
  $region13: #{relu_pallas.1} parent=0 // pred_fallthru
    _

</llo_original>
